<compile_context>
chip_gen: v6e
topology: v6e:2x2x1
jax: 0.10.0
libtpu: 0.0.40
codegen_flags: <defaults>
</compile_context>

<pallas_src>
import functools

import jax
import jax.numpy as jnp
from jax import lax
from jax.experimental import pallas as pl
from jax.experimental.pallas import tpu as pltpu

_LANE = 128        # vreg lane width
_SUBLANE = 8       # vreg sublane count (32-bit)
_CHUNK_ROWS = 512  # in-kernel compute chunk: 512 x 128 x 4B = 256 KiB f32


def _sublane_multiple(*dtypes):
    """Dtype-aware sublane rounding (8 for 4B, 16 for 2B, 32 for 1B types)."""
    m = _SUBLANE
    for dt in dtypes:
        item = jnp.dtype(dt).itemsize
        m = max(m, _SUBLANE * max(1, 4 // item))
    return m


def _vmem_capacity_bytes():
    try:
        return int(pltpu.get_tpu_info().vmem_capacity_bytes)
    except Exception:
        return 64 << 20  # conservative (v7x-sized) fallback


def _num_tensorcores():
    """2 TensorCores per chip on v7x, 1 on v5e/v6e."""
    try:
        kind = jax.devices()[0].device_kind.lower()
    except Exception:
        return 1
    return 2 if "v7" in kind else 1


def _bce_masked_kernel(x_ref, y_ref, sum_ref, cnt_ref, *,
                       ignore_label, rows_valid, row_tile, chunk_rows):
    """Masked BCE-with-logits over one (row_tile, 128) block.

    Accumulates directly into the resident (8,128) f32 output blocks; rows at
    or beyond `rows_valid` (ragged / out-of-range padding) are masked out with
    an in-kernel row-index iota.
    """
    p = pl.program_id(0)
    j = pl.program_id(1)
    inner = pl.num_programs(1)

    @pl.when(j == 0)
    def _():
        sum_ref[...] = jnp.zeros_like(sum_ref)
        cnt_ref[...] = jnp.zeros_like(cnt_ref)

    # UNclamped global row offset of this block (the index_map clamps the DMA
    # for fully out-of-range blocks; the mask below uses the true offset so
    # such blocks contribute exactly zero).
    row_base = (p * inner + j) * row_tile

    def chunk_body(c):
        r0 = pl.multiple_of(c * chunk_rows, chunk_rows)
        x = x_ref[pl.ds(r0, chunk_rows), :].astype(jnp.float32)  # logits
        y = y_ref[pl.ds(r0, chunk_rows), :].astype(jnp.float32)  # targets

        rid = (row_base + r0
               + lax.broadcasted_iota(jnp.int32, (chunk_rows, _LANE), 0))
        in_bounds = rid < rows_valid

        # target_mask = (target >= 0) & (target != ignore_label), done after
        # the f32 cast; exact for ignore_label=255 (and any small label).
        mask = jnp.logical_and(
            in_bounds,
            jnp.logical_and(y >= 0.0, y != jnp.float32(ignore_label)))

        # Numerically-stable binary_cross_entropy_with_logits:
        #   max(x, 0) - x*y + log(1 + exp(-|x|))
        loss = jnp.maximum(x, 0.0) - x * y + jnp.log1p(jnp.exp(-jnp.abs(x)))
        loss = jnp.where(mask, loss, 0.0)
        msk = mask.astype(jnp.float32)

        sum_ref[...] += loss.reshape(chunk_rows // _SUBLANE,
                                     _SUBLANE, _LANE).sum(axis=0)
        cnt_ref[...] += msk.reshape(chunk_rows // _SUBLANE,
                                    _SUBLANE, _LANE).sum(axis=0)

    pl.loop(0, row_tile // chunk_rows)(chunk_body)


def _masked_bce_sum_count(x, y, ignore_label):
    """Plain-JAX masked BCE-with-logits sum + valid count (tail / reference)."""
    x = x.astype(jnp.float32)
    y = y.astype(jnp.float32)
    mask = jnp.logical_and(y >= 0.0, y != jnp.float32(ignore_label))
    loss = jnp.maximum(x, 0.0) - x * y + jnp.log1p(jnp.exp(-jnp.abs(x)))
    loss = jnp.where(mask, loss, 0.0)
    return jnp.sum(loss), jnp.sum(mask.astype(jnp.float32))


def bce_with_logits_loss_2d(predict, target, size_average=True,
                            ignore_label=255):
    """Matches BCEWithLogitsLoss2d.forward(predict, target, weight=None)."""
    assert predict.ndim == 4, "predict must be 4-D (N, C, H, W)"
    assert target.ndim == 4, "target must be 4-D (N, C, H, W)"
    assert predict.shape[0] == target.shape[0]
    assert predict.shape[2] == target.shape[2]
    assert predict.shape[3] == target.shape[3]
    # TODO(synk): optional per-element `weight` argument not implemented
    # (weight=None path only).

    total = int(predict.size)
    x_flat = jnp.ravel(predict)  # keep original dtype (bf16 stays bf16)
    y_flat = jnp.ravel(target)

    loss_sum = jnp.float32(0.0)
    count = jnp.float32(0.0)

    rows_all = total // _LANE
    sub = _sublane_multiple(predict.dtype, target.dtype)
    max_item = max(jnp.dtype(predict.dtype).itemsize,
                   jnp.dtype(target.dtype).itemsize)
    vmem_cap = _vmem_capacity_bytes()

    # Pick the streaming block height (multiple of the compute chunk when
    # large, dtype-sublane-aligned when small).
    if rows_all >= _CHUNK_ROWS:
        buf_budget = max(vmem_cap // 16, _CHUNK_ROWS * _LANE * max_item)
        target_rows = ((buf_budget // (_LANE * max_item))
                       // _CHUNK_ROWS) * _CHUNK_ROWS
        row_tile = min(target_rows, (rows_all // _CHUNK_ROWS) * _CHUNK_ROWS)
        chunk_rows = _CHUNK_ROWS
    elif rows_all >= sub:
        row_tile = (rows_all // sub) * sub
        chunk_rows = row_tile
    else:
        row_tile = 0  # too small: everything goes through the plain-JAX tail

    kernel_elems = 0
    if row_tile > 0:
        rows_valid = rows_all
        kernel_elems = rows_valid * _LANE
        num_blocks = pl.cdiv(rows_valid, row_tile)
        n_par = max(1, min(_num_tensorcores(), num_blocks))
        inner = pl.cdiv(num_blocks, n_par)

        # Lane-dense (rows, 128) operands.  Pure bitcast reshape when the
        # element count divides 128; otherwise the <128-element remainder
        # forces a prefix-slice copy of the operands.
        # TODO(synk): avoid that copy (total % 128 != 0) by passing the raw
        # flat arrays with memory_space=pl.ANY + manual DMA.
        if kernel_elems == total:
            x2 = x_flat.reshape(rows_valid, _LANE)
            y2 = y_flat.reshape(rows_valid, _LANE)
        else:
            x2 = x_flat[:kernel_elems].reshape(rows_valid, _LANE)
            y2 = y_flat[:kernel_elems].reshape(rows_valid, _LANE)

        kernel = functools.partial(
            _bce_masked_kernel,
            ignore_label=float(ignore_label),
            rows_valid=rows_valid,
            row_tile=row_tile,
            chunk_rows=chunk_rows)

        def in_map(p_, j_):
            # Clamp fully out-of-range trailing blocks (when num_blocks does
            # not divide n_par*inner); the kernel masks them to zero anyway.
            return (jnp.minimum(p_ * inner + j_, num_blocks - 1), 0)

        in_bytes_per_step = row_tile * _LANE * (x2.dtype.itemsize
                                                + y2.dtype.itemsize)
        # Double-buffered inputs + compute-chunk intermediates + headroom,
        # capped at 3/4 of physical VMEM (fits v5e/v6e 128 MiB and v7x 64 MiB).
        vmem_limit = int(min(vmem_cap * 3 // 4,
                             max(2 * in_bytes_per_step + (16 << 20), 32 << 20)))

        def build_and_run(dim_semantics):
            return pl.pallas_call(
                kernel,
                out_shape=(
                    jax.ShapeDtypeStruct((n_par * _SUBLANE, _LANE), jnp.float32),
                    jax.ShapeDtypeStruct((n_par * _SUBLANE, _LANE), jnp.float32)),
                grid_spec=pltpu.PrefetchScalarGridSpec(
                    num_scalar_prefetch=0,
                    grid=(n_par, inner),
                    in_specs=[
                        pl.BlockSpec((row_tile, _LANE), in_map),
                        pl.BlockSpec((row_tile, _LANE), in_map),
                    ],
                    out_specs=(
                        pl.BlockSpec((_SUBLANE, _LANE), lambda p_, j_: (p_, 0)),
                        pl.BlockSpec((_SUBLANE, _LANE), lambda p_, j_: (p_, 0)),
                    ),
                ),
                compiler_params=pltpu.CompilerParams(
                    dimension_semantics=dim_semantics,
                    vmem_limit_bytes=vmem_limit),
                cost_estimate=pl.CostEstimate(
                    flops=10 * kernel_elems,
                    transcendentals=2 * kernel_elems,
                    bytes_accessed=kernel_elems * (x2.dtype.itemsize
                                                   + y2.dtype.itemsize)
                    + 2 * n_par * _SUBLANE * _LANE * 4),
            )(x2, y2)

        if n_par > 1:
            # v7x: ask for a genuine 2-TensorCore split of the leading axis;
            # fall back to the plain "parallel" hint if that fails to lower.
            try:
                partial_sum, partial_cnt = build_and_run(
                    (pltpu.CORE_PARALLEL, pltpu.ARBITRARY))
            except Exception:
                partial_sum, partial_cnt = build_and_run(
                    ("parallel", "arbitrary"))
        else:
            partial_sum, partial_cnt = build_and_run(("parallel", "arbitrary"))

        loss_sum = loss_sum + jnp.sum(partial_sum)
        count = count + jnp.sum(partial_cnt)

    # <128-element remainder (or tiny inputs): plain JAX.
    if kernel_elems < total:
        t_sum, t_cnt = _masked_bce_sum_count(
            x_flat[kernel_elems:], y_flat[kernel_elems:], ignore_label)
        loss_sum = loss_sum + t_sum
        count = count + t_cnt

    if size_average:
        # Safe denominator (no inf/nan in the dead branch); if no valid pixels
        # return 0, mirroring the module's empty-target path.
        mean = loss_sum / jnp.maximum(count, jnp.float32(1.0))
        return jnp.where(count > 0, mean, jnp.float32(0.0))
    return loss_sum


def _reference_loss(predict, target, ignore_label=255):
    ref_sum, ref_cnt = _masked_bce_sum_count(
        jnp.ravel(predict), jnp.ravel(target), ignore_label)
    return jnp.where(ref_cnt > 0,
                     ref_sum / jnp.maximum(ref_cnt, 1.0), jnp.float32(0.0))


if __name__ == "__main__":
    key = jax.random.PRNGKey(0)
    k1, k2, k3, k4, k5, k6 = jax.random.split(key, 6)

    # 1) Small NCHW segmentation-style input (aligned: total % 128 == 0).
    predict = jax.random.normal(k1, (2, 4, 16, 16), dtype=jnp.float32)
    tgt = (jax.random.uniform(k2, (2, 4, 16, 16)) > 0.5).astype(jnp.float32)
    ignore = jax.random.uniform(k3, (2, 4, 16, 16)) > 0.8
    target = jnp.where(ignore, jnp.float32(255.0), tgt)

    loss = bce_with_logits_loss_2d(predict, target, size_average=True,
                                   ignore_label=255)
    jax.block_until_ready(loss)
    ref = _reference_loss(predict, target, 255)
    assert jnp.allclose(loss, ref, rtol=1e-4, atol=1e-6), (loss, ref)

    # 2) Ragged shape (exercises the in-kernel row mask + plain-JAX remainder).
    predict_r = jax.random.normal(k4, (2, 3, 15, 17), dtype=jnp.float32)
    tgt_r = (jax.random.uniform(k5, (2, 3, 15, 17)) > 0.5).astype(jnp.float32)
    ignore_r = jax.random.uniform(k6, (2, 3, 15, 17)) > 0.8
    target_r = jnp.where(ignore_r, jnp.float32(255.0), tgt_r)

    loss_r = bce_with_logits_loss_2d(predict_r, target_r, size_average=True,
                                     ignore_label=255)
    jax.block_until_ready(loss_r)
    ref_r = _reference_loss(predict_r, target_r, 255)
    assert jnp.allclose(loss_r, ref_r, rtol=1e-4, atol=1e-6), (loss_r, ref_r)

    # 3) bf16 inputs (exercises in-kernel cast + 16-row sublane alignment).
    loss_b = bce_with_logits_loss_2d(predict.astype(jnp.bfloat16),
                                     target.astype(jnp.bfloat16),
                                     size_average=True, ignore_label=255)
    jax.block_until_ready(loss_b)
    ref_b = _reference_loss(predict.astype(jnp.bfloat16),
                            target.astype(jnp.bfloat16), 255)
    assert jnp.allclose(loss_b, ref_b, rtol=1e-4, atol=1e-6), (loss_b, ref_b)

    print("KERNEL_OK")
</pallas_src>

<mosaic_0001>
module attributes {stable_mosaic.version = 11 : i64} {
  func.func @_bce_masked_kernel(%arg0: i32, %arg1: i32, %arg2: memref<16x128xf32, #tpu.memory_space<vmem>>, %arg3: memref<16x128xf32, #tpu.memory_space<vmem>>, %arg4: memref<8x128xf32, #tpu.memory_space<vmem>>, %arg5: memref<8x128xf32, #tpu.memory_space<vmem>>) attributes {dimension_semantics = [#tpu.dimension_semantics<parallel>, #tpu.dimension_semantics<arbitrary>], iteration_bounds = array<i64: 1, 1>, scalar_prefetch = 0 : i64, scratch_operands = 0 : i64, tpu.core_type = #tpu.core_type<tc>, window_params = [{transform_indices = @transform_0, window_bounds = array<i64: 16, 128>}, {transform_indices = @transform_1, window_bounds = array<i64: 16, 128>}, {transform_indices = @transform_2, window_bounds = array<i64: 8, 128>}, {transform_indices = @transform_3, window_bounds = array<i64: 8, 128>}]} {
    %c0_i32 = arith.constant 0 : i32
    %0 = arith.cmpi eq, %arg1, %c0_i32 : i32
    %1 = arith.extui %0 : i1 to i32
    %c0_i32_0 = arith.constant 0 : i32
    %2 = arith.cmpi ne, %1, %c0_i32_0 : i32
    scf.if %2 {
      %cst_22 = arith.constant 0.000000e+00 : f32
      %50 = vector.broadcast %cst_22 : f32 to vector<8x128xf32>
      %c0_23 = arith.constant 0 : index
      %c0_24 = arith.constant 0 : index
      %51 = vector.load %arg4[%c0_23, %c0_24] : memref<8x128xf32, #tpu.memory_space<vmem>>, vector<8x128xf32>
      tpu.vector_store %arg4[%c0_23, %c0_24], %50 {strides = array<i32>} : memref<8x128xf32, #tpu.memory_space<vmem>>, vector<8x128xf32>,
      %cst_25 = arith.constant 0.000000e+00 : f32
      %52 = vector.broadcast %cst_25 : f32 to vector<8x128xf32>
      %c0_26 = arith.constant 0 : index
      %c0_27 = arith.constant 0 : index
      %53 = vector.load %arg5[%c0_26, %c0_27] : memref<8x128xf32, #tpu.memory_space<vmem>>, vector<8x128xf32>
      tpu.vector_store %arg5[%c0_26, %c0_27], %52 {strides = array<i32>} : memref<8x128xf32, #tpu.memory_space<vmem>>, vector<8x128xf32>,
    } else {
    }
    %c1_i32 = arith.constant 1 : i32
    %3 = arith.muli %arg0, %c1_i32 : i32
    %4 = arith.addi %3, %arg1 : i32
    %c16_i32 = arith.constant 16 : i32
    %5 = arith.muli %4, %c16_i32 : i32
    %c0_i32_1 = arith.constant 0 : i32
    %c1_i32_2 = arith.constant 1 : i32
    %6 = arith.muli %c0_i32_1, %c1_i32_2 : i32
    %c0_i32_3 = arith.constant 0 : i32
    %7 = arith.addi %c0_i32_3, %6 : i32
    %c16_i32_4 = arith.constant 16 : i32
    %8 = arith.muli %7, %c16_i32_4 : i32
    %9 = tpu.assume_multiple %8, 16 : i32
    %10 = arith.index_cast %9 : i32 to index
    %c0 = arith.constant 0 : index
    %11 = vector.load %arg2[%10, %c0] : memref<16x128xf32, #tpu.memory_space<vmem>>, vector<16x128xf32>
    %12 = arith.index_cast %9 : i32 to index
    %c0_5 = arith.constant 0 : index
    %13 = vector.load %arg3[%12, %c0_5] : memref<16x128xf32, #tpu.memory_space<vmem>>, vector<16x128xf32>
    %14 = arith.addi %5, %9 : i32
    %15 = tpu.iota {dimensions = array<i32: 0>} : vector<16x128xi32>
    %16 = vector.broadcast %14 : i32 to vector<16x128xi32>
    %17 = arith.addi %16, %15 : vector<16x128xi32>
    %c16_i32_6 = arith.constant 16 : i32
    %18 = vector.broadcast %c16_i32_6 : i32 to vector<16x128xi32>
    %19 = arith.cmpi slt, %17, %18 : vector<16x128xi32>
    %cst = arith.constant 0.000000e+00 : f32
    %20 = vector.broadcast %cst : f32 to vector<16x128xf32>
    %21 = arith.cmpf oge, %13, %20 : vector<16x128xf32>
    %cst_7 = arith.constant 2.550000e+02 : f32
    %22 = vector.broadcast %cst_7 : f32 to vector<16x128xf32>
    %23 = arith.cmpf one, %13, %22 : vector<16x128xf32>
    %24 = arith.andi %21, %23 : vector<16x128xi1>
    %25 = arith.andi %19, %24 : vector<16x128xi1>
    %cst_8 = arith.constant 0.000000e+00 : f32
    %26 = vector.broadcast %cst_8 : f32 to vector<16x128xf32>
    %27 = arith.maximumf %11, %26 : vector<16x128xf32>
    %28 = arith.mulf %11, %13 : vector<16x128xf32>
    %29 = arith.subf %27, %28 : vector<16x128xf32>
    %30 = math.absf %11 : vector<16x128xf32>
    %cst_9 = arith.constant 0.000000e+00 : f32
    %31 = vector.broadcast %cst_9 : f32 to vector<16x128xf32>
    %32 = arith.subf %31, %30 : vector<16x128xf32>
    %33 = math.exp %32 : vector<16x128xf32>
    %34 = math.log1p %33 : vector<16x128xf32>
    %35 = arith.addf %29, %34 : vector<16x128xf32>
    %cst_10 = arith.constant 0.000000e+00 : f32
    %36 = vector.broadcast %cst_10 : f32 to vector<16x128xf32>
    %37 = arith.select %25, %35, %36 : vector<16x128xi1>, vector<16x128xf32>
    %38 = arith.extui %25 : vector<16x128xi1> to vector<16x128xi32>
    %39 = arith.sitofp %38 : vector<16x128xi32> to vector<16x128xf32>
    %c0_11 = arith.constant 0 : index
    %c0_12 = arith.constant 0 : index
    %40 = vector.load %arg4[%c0_11, %c0_12] : memref<8x128xf32, #tpu.memory_space<vmem>>, vector<8x128xf32>
    %41 = vector.shape_cast %37 : vector<16x128xf32> to vector<2x8x128xf32>
    %cst_13 = arith.constant dense<0.000000e+00> : vector<8x128xf32>
    %42 = vector.multi_reduction <add>, %41, %cst_13 [0] : vector<2x8x128xf32> to vector<8x128xf32>
    %43 = arith.addf %40, %42 : vector<8x128xf32>
    %c0_14 = arith.constant 0 : index
    %c0_15 = arith.constant 0 : index
    %44 = vector.load %arg4[%c0_14, %c0_15] : memref<8x128xf32, #tpu.memory_space<vmem>>, vector<8x128xf32>
    tpu.vector_store %arg4[%c0_14, %c0_15], %43 {strides = array<i32>} : memref<8x128xf32, #tpu.memory_space<vmem>>, vector<8x128xf32>,
    %c0_16 = arith.constant 0 : index
    %c0_17 = arith.constant 0 : index
    %45 = vector.load %arg5[%c0_16, %c0_17] : memref<8x128xf32, #tpu.memory_space<vmem>>, vector<8x128xf32>
    %46 = vector.shape_cast %39 : vector<16x128xf32> to vector<2x8x128xf32>
    %cst_18 = arith.constant dense<0.000000e+00> : vector<8x128xf32>
    %47 = vector.multi_reduction <add>, %46, %cst_18 [0] : vector<2x8x128xf32> to vector<8x128xf32>
    %48 = arith.addf %45, %47 : vector<8x128xf32>
    %c0_19 = arith.constant 0 : index
    %c0_20 = arith.constant 0 : index
    %49 = vector.load %arg5[%c0_19, %c0_20] : memref<8x128xf32, #tpu.memory_space<vmem>>, vector<8x128xf32>
    tpu.vector_store %arg5[%c0_19, %c0_20], %48 {strides = array<i32>} : memref<8x128xf32, #tpu.memory_space<vmem>>, vector<8x128xf32>,
    %c1_i32_21 = arith.constant 1 : i32
    return
  }
  func.func @transform_0(%arg0: i32, %arg1: i32) -> (i32, i32) {
    %c1_i32 = arith.constant 1 : i32
    %0 = arith.muli %arg0, %c1_i32 : i32
    %1 = arith.addi %0, %arg1 : i32
    %c0_i32 = arith.constant 0 : i32
    %2 = arith.minsi %1, %c0_i32 : i32
    %c0_i32_0 = arith.constant 0 : i32
    %c0_i32_1 = arith.constant 0 : i32
    return %2, %c0_i32_0 : i32, i32
  }
  func.func @transform_1(%arg0: i32, %arg1: i32) -> (i32, i32) {
    %c1_i32 = arith.constant 1 : i32
    %0 = arith.muli %arg0, %c1_i32 : i32
    %1 = arith.addi %0, %arg1 : i32
    %c0_i32 = arith.constant 0 : i32
    %2 = arith.minsi %1, %c0_i32 : i32
    %c0_i32_0 = arith.constant 0 : i32
    %c0_i32_1 = arith.constant 0 : i32
    return %2, %c0_i32_0 : i32, i32
  }
  func.func @transform_2(%arg0: i32, %arg1: i32) -> (i32, i32) {
    %c0_i32 = arith.constant 0 : i32
    %c0_i32_0 = arith.constant 0 : i32
    return %arg0, %c0_i32 : i32, i32
  }
  func.func @transform_3(%arg0: i32, %arg1: i32) -> (i32, i32) {
    %c0_i32 = arith.constant 0 : i32
    %c0_i32_0 = arith.constant 0 : i32
    return %arg0, %c0_i32 : i32, i32
  }
}

</mosaic_0001>

<llo_original>
// kernel: tpu_custom_call.1
$region0: #{tpu_custom_call.1}
  #allocation0 [shape = 'u32[]', space=smem, size = 0x4, offset = 0x4, fixed_abs, tag = 'smem constant byte address 0x4 - core index']
  #allocation1 [shape = 'u32[144,128]{1,0:T(1,128)}', space=vmem, size = 0x12000, scoped, tag = 'internal scratch']
  %s0 = inlined_call_operand.hbm [shape: f32[16,128], index: 0, kind: input, shape index: {}]
  %s1 = inlined_call_operand.hbm [shape: f32[16,128], index: 1, kind: input, shape index: {}]
  %s2 = inlined_call_operand.hbm [shape: f32[8,128], index: 2, kind: output, shape index: {0}]
  %s3 = inlined_call_operand.hbm [shape: f32[8,128], index: 3, kind: output, shape index: {1}]
  %4 = xla_tuple %s2, %s3
  %s5 = sld [smem:[#allocation0]]
  $region38: #{tpu_custom_call.1} parent=0
    _
  %s7 = ssub.s32 1, %s5
  %s8 = scalar_select 0, %s7, %s5
  $region1: #{tpu_custom_call.1} parent=0
    #allocation2 [shape = 'u8[8192]{0}', space=vmem, size = 0x2000, scoped, tag = 'input window, operand 0, single buffered']
    #allocation3 [shape = 's32[1]{0}', space=sflag, size = 0x4, scoped, tag = 'scoped memory for tpu_custom_call.1']
    #allocation4 [shape = 's32[1]{0}', space=sflag, size = 0x4, scoped, tag = 'scoped memory for tpu_custom_call.1']
    #allocation5 [shape = 'u8[8192]{0}', space=vmem, size = 0x2000, scoped, tag = 'input window, operand 1, single buffered']
    #allocation6 [shape = 's32[1]{0}', space=sflag, size = 0x4, scoped, tag = 'scoped memory for tpu_custom_call.1']
    #allocation7 [shape = 'u8[4096]{0}', space=vmem, size = 0x1000, scoped, tag = 'output window, operand 0, single buffered']
    #allocation8 [shape = 'u8[4096]{0}', space=vmem, size = 0x1000, scoped, tag = 'output window, operand 1, single buffered']
    #allocation9 [shape = 's32[1]{0}', space=sflag, size = 0x4, scoped, tag = 'scoped memory for tpu_custom_call.1']
    %9 = vsyncpa [#allocation3], 0
    %10 = vsyncpa [#allocation6], 0
    %11 = vsyncpa [#allocation4], 0
    %12 = vsyncpa [#allocation9], 0
    // Predicated region
    $region2: #{tpu_custom_call.1} parent=1 // pred_check
      _
    $region3: #{tpu_custom_call.1} parent=1 // pred_check_branch
      %14 = sbr.rel (0) target = $region5
    $region4: #{tpu_custom_call.1} parent=1 // pred_region
      %s15 = sadd.s32 0, 0
      %p16 = scmp.lt.s32.totalorder %s15, 0
      %s17 = scalar_select %p16, %s15, 0
      %s18 = smul.u32 2, %s17
      %s20 = ssub.s32 256, 256
      %21 = vsyncadd [#allocation3], %s20
      %s22 = smul.addr %s18, 128
      %s23 = scalar_lea.hbm %s0, %s22
      %s24 = sshll.u32 [#allocation2], 4
      %s25 = int_to_ptr.vmem [resolvable:$true] %s24
      %30 = dma.hbm_to_vmem [thread:$0]  %s23, 256, %s25, [#allocation3], 128, 128, 8
    $region5: #{tpu_custom_call.1} parent=1 // pred_fallthru
      _
    // Predicated region
    $region6: #{tpu_custom_call.1} parent=1 // pred_check
      _
    $region7: #{tpu_custom_call.1} parent=1 // pred_check_branch
      %32 = sbr.rel (0) target = $region9
    $region8: #{tpu_custom_call.1} parent=1 // pred_region
      %s33 = sadd.s32 0, 0
      %p34 = scmp.lt.s32.totalorder %s33, 0
      %s35 = scalar_select %p34, %s33, 0
      %s36 = smul.u32 2, %s35
      %s38 = ssub.s32 256, 256
      %39 = vsyncadd [#allocation6], %s38
      %s40 = smul.addr %s36, 128
      %s41 = scalar_lea.hbm %s1, %s40
      %s42 = sshll.u32 [#allocation5], 4
      %s43 = int_to_ptr.vmem [resolvable:$true] %s42
      %48 = dma.hbm_to_vmem [thread:$0]  %s41, 256, %s43, [#allocation6], 128, 128, 8
    $region9: #{tpu_custom_call.1} parent=1 // pred_fallthru
      _
    // Predicated region
    $region10: #{tpu_custom_call.1} parent=1 // pred_check
      _
    $region11: #{tpu_custom_call.1} parent=1 // pred_check_branch
      %50 = sbr.rel (0) target = $region13
    $region12: #{tpu_custom_call.1} parent=1 // pred_region
      %51 = dma.done [#allocation3], 256
    $region13: #{tpu_custom_call.1} parent=1 // pred_fallthru
      _
    // Predicated region
    $region14: #{tpu_custom_call.1} parent=1 // pred_check
      _
    $region15: #{tpu_custom_call.1} parent=1 // pred_check_branch
      %53 = sbr.rel (0) target = $region17
    $region16: #{tpu_custom_call.1} parent=1 // pred_region
      %54 = dma.done [#allocation6], 256
    $region17: #{tpu_custom_call.1} parent=1 // pred_fallthru
      _
    %s55 = sadd.s32 0, 0
    %p56 = scmp.lt.s32.totalorder %s55, 0
    %s57 = scalar_select %p56, %s55, 0
    %s58 = smul.u32 2, %s57
    %s59 = sadd.s32 0, 0
    %p60 = scmp.lt.s32.totalorder %s59, 0
    %s61 = scalar_select %p60, %s59, 0
    %s62 = smul.u32 2, %s61
    %p63 = scmp.eq.s32.totalorder 0, 0
    // Predicated region
    $region18: #{tpu_custom_call.1} parent=1 // pred_check
      %p64 = pneg %p63
    $region19: #{tpu_custom_call.1} parent=1 // pred_check_branch
      %66 = sbr.rel (%p64) target = $region21
    $region20: #{tpu_custom_call.1} parent=1 // pred_region
      %67 = vst [vmem:[#allocation7] sm:$0xff] 0.0
      %68 = vst [vmem:[#allocation8] sm:$0xff] 0.0
    $region21: #{tpu_custom_call.1} parent=1 // pred_fallthru
      _
    %s69 = sadd.s32 0, 0
    %s70 = smul.u32 %s69, 16
    %v71 = vld [vmem:[#allocation2] sm:$0xff]
    %v72 = vld [vmem:[#allocation2 + $0x8] sm:$0xff]
    %v73 = vld [vmem:[#allocation5] sm:$0xff]
    %v74 = vld [vmem:[#allocation5 + $0x8] sm:$0xff]
    %s75 = sadd.s32 %s70, 0
    %v76 = vlaneseq
    %v77 = vshrl.u32 %v76, 7
    %v78 = vadd.s32 %v77, 8
    %v79 = vstv %s75
    %v80 = vadd.s32 %v79, %v77
    %v81 = vadd.s32 %v79, %v78
    %vm82 = vcmp.lt.s32.totalorder %v80, 16
    %vm83 = vcmp.lt.s32.totalorder %v81, 16
    %vm84 = vcmp.ge.f32.partialorder %v73, 0.0
    %vm85 = vcmp.ge.f32.partialorder %v74, 0.0
    %vm86 = vcmp.ne.f32.partialorder %v73, 255.0
    %vm87 = vcmp.ne.f32.partialorder %v74, 255.0
    %vm88 = vmand %vm84, %vm86
    %vm89 = vmand %vm85, %vm87
    %vm90 = vmand %vm82, %vm88
    %vm91 = vmand %vm83, %vm89
    %v92 = vmax.f32 %v71, 0.0
    %v93 = vmax.f32 %v72, 0.0
    %v94 = vmul.f32 %v71, %v73
    %v95 = vmul.f32 %v72, %v74
    %v96 = vsub.f32 %v92, %v94
    %v97 = vsub.f32 %v93, %v95
    %v98 = vand.u32 2147483647, %v71
    %v99 = vand.u32 2147483647, %v72
    %v100 = vsub.f32 0.0, %v98
    %v101 = vsub.f32 0.0, %v99
    %v102 = vmul.f32 %v100, 1.442695
    %v103 = vpow.pop %v102
    %v104 = vmul.f32 %v101, 1.442695
    %v105 = vpow.pop %v104
    %v106 = vadd.f32 %v103, 1.0
    %v107 = vlog2.pop %v106
    %v108 = vmul.f32 %v107, 0.6931472
    %v109 = vmul.f32 -0.5, %v103
    %v110 = vadd.f32 %v109, 1.0
    %v111 = vmul.f32 %v110, %v103
    %v112 = vand.u32 2147483647, %v103
    %vm113 = vcmp.lt.f32.partialorder %v112, 0.0004427343
    %v114 = vsel %vm113, %v111, %v108
    %v115 = vadd.f32 %v105, 1.0
    %v116 = vlog2.pop %v115
    %v117 = vmul.f32 %v116, 0.6931472
    %v118 = vmul.f32 -0.5, %v105
    %v119 = vadd.f32 %v118, 1.0
    %v120 = vmul.f32 %v119, %v105
    %v121 = vand.u32 2147483647, %v105
    %vm122 = vcmp.lt.f32.partialorder %v121, 0.0004427343
    %v123 = vsel %vm122, %v120, %v117
    %v124 = vadd.f32 %v96, %v114
    %v125 = vadd.f32 %v97, %v123
    %v126 = vsel %vm90, %v124, 0.0
    %v127 = vsel %vm91, %v125, 0.0
    %v128 = vsel %vm90, 1, 0
    %v129 = vsel %vm91, 1, 0
    %v130 = vcvt.s32.f32 %v128
    %v131 = vcvt.s32.f32 %v129
    %v132 = vld [vmem:[#allocation7] sm:$0xff]
    %v133 = vadd.f32 %v126, %v127
    %v134 = vadd.f32 %v132, %v133
    %135 = vst [vmem:[#allocation7] sm:$0xff] %v134
    %v136 = vld [vmem:[#allocation8] sm:$0xff]
    %v137 = vadd.f32 %v130, %v131
    %v138 = vadd.f32 %v136, %v137
    %139 = vst [vmem:[#allocation8] sm:$0xff] %v138
    // Predicated region
    $region22: #{tpu_custom_call.1} parent=1 // pred_check
      _
    $region23: #{tpu_custom_call.1} parent=1 // pred_check_branch
      %141 = sbr.rel (0) target = $region25
    $region24: #{tpu_custom_call.1} parent=1 // pred_region
      %s143 = ssub.s32 128, 128
      %144 = vsyncadd [#allocation4], %s143
      %s146 = sshll.u32 [#allocation7], 4
      %s147 = int_to_ptr.vmem [resolvable:$true] %s146
      %149 = dma.vmem_to_hbm [thread:$0]  %s147, 128, %s2, [#allocation4]
    $region25: #{tpu_custom_call.1} parent=1 // pred_fallthru
      _
    // Predicated region
    $region26: #{tpu_custom_call.1} parent=1 // pred_check
      _
    $region27: #{tpu_custom_call.1} parent=1 // pred_check_branch
      %151 = sbr.rel (0) target = $region29
    $region28: #{tpu_custom_call.1} parent=1 // pred_region
      %s153 = ssub.s32 128, 128
      %154 = vsyncadd [#allocation9], %s153
      %s156 = sshll.u32 [#allocation8], 4
      %s157 = int_to_ptr.vmem [resolvable:$true] %s156
      %159 = dma.vmem_to_hbm [thread:$0]  %s157, 128, %s3, [#allocation9]
    $region29: #{tpu_custom_call.1} parent=1 // pred_fallthru
      _
    // Predicated region
    $region30: #{tpu_custom_call.1} parent=1 // pred_check
      _
    $region31: #{tpu_custom_call.1} parent=1 // pred_check_branch
      %161 = sbr.rel (0) target = $region33
    $region32: #{tpu_custom_call.1} parent=1 // pred_region
      %162 = dma.done [#allocation4], 128
    $region33: #{tpu_custom_call.1} parent=1 // pred_fallthru
      _
    // Predicated region
    $region34: #{tpu_custom_call.1} parent=1 // pred_check
      _
    $region35: #{tpu_custom_call.1} parent=1 // pred_check_branch
      %164 = sbr.rel (0) target = $region37
    $region36: #{tpu_custom_call.1} parent=1 // pred_region
      %165 = dma.done [#allocation9], 128
    $region37: #{tpu_custom_call.1} parent=1 // pred_fallthru
      _
    %166 = vsyncpa [#allocation3], 1
    %167 = vsyncpa [#allocation6], 1
    %168 = vsyncpa [#allocation4], 1
    %169 = vsyncpa [#allocation9], 1

</llo_original>
